<compile_context>
chip_gen: v7x
topology: tpu7x:2x2x1
jax: 0.10.0
libtpu: 0.0.40
codegen_flags: <defaults>
</compile_context>

<pallas_src>
import functools

import jax
import jax.numpy as jnp
from jax import lax
from jax.experimental import pallas as pl
from jax.experimental.pallas import tpu as pltpu


def _round_up(a, b):
    return ((a + b - 1) // b) * b


def _similarity_kernel(x_ref, y_ref, o_ref, *, eps, inv_temp):
    # x_ref: (tn, H) native dtype (resident across j); y_ref: (tm, H) (streamed).
    x = x_ref[...]
    y = y_ref[...]

    # MXU: contract the last (lane) axis of both operands directly — no transpose
    # materialized; bf16 operands run at full MXU rate with f32 accumulation.
    dot = lax.dot_general(
        x, y,
        dimension_numbers=(((1,), (1,)), ((), ())),
        preferred_element_type=jnp.float32)                      # (tn, tm) f32

    # Squared norms computed in-kernel from the already-resident tiles (removes the
    # wrapper-side HBM norm pass). Cost ~ (tn + tm) * H VPU flops << tn*tm*H MXU.
    xf = x.astype(jnp.float32)
    yf = y.astype(jnp.float32)
    nx = jnp.sum(xf * xf, axis=-1, keepdims=True)                # (tn, 1) f32
    ny = jnp.sum(yf * yf, axis=-1, keepdims=True)                # (tm, 1) f32

    # Outer product nx * ny^T via the same contraction pattern (K=1) — avoids any
    # in-kernel transpose of a (tm,1) tile.
    norm_prod = lax.dot_general(
        nx, ny,
        dimension_numbers=(((1,), (1,)), ((), ())),
        preferred_element_type=jnp.float32)                      # (tn, tm) f32

    # rsqrt goes to the EUP (free slot under an MXU-bound kernel); clamp matches
    # PyTorch's eps clamp on the norm product. 1/temp applied explicitly (VPU mul,
    # hidden under the MXU) — no fragile algebraic folding.
    inv = lax.rsqrt(jnp.maximum(norm_prod, eps * eps))           # (tn, tm)
    o_ref[...] = (dot * inv * inv_temp).astype(o_ref.dtype)


def similarity(x, y, temp, *, eps=1e-8, tn=None, tm=256, out_dtype=None,
               vmem_budget_bytes=24 << 20):
    """cosine_similarity(x[:, None, :], y[None, :, :], dim=-1) / temp -> (N, M).

    Equivalent to Similarity(temp)(x.unsqueeze(1), y.unsqueeze(0)) in PyTorch.
    x: (N, H), y: (M, H). Works for any N, M (padded to tile multiples internally)
    and any input dtype (matmul runs in the native dtype, f32 accumulate).
    """
    N, H = x.shape
    M, Hy = y.shape
    assert H == Hy, "feature dims must match"
    if out_dtype is None:
        out_dtype = jnp.float32
    out_itemsize = jnp.dtype(out_dtype).itemsize

    itemsize = jnp.dtype(x.dtype).itemsize
    # Sublane granule for the input dtype (avoid packed-sublane padding).
    sub = {1: 32, 2: 16, 4: 8}.get(itemsize, 8)

    # x is the resident operand (its block index is constant across j), so a large
    # tn divides y's HBM re-read count; tm stays lane-dense at 256 (128 min).
    if tn is None:
        tn = 1024 if itemsize <= 2 else 512
    tn = min(tn, _round_up(N, sub))
    tm = min(tm, _round_up(M, 128))

    # VMEM budget: double-buffered x / y input tiles + double-buffered output tile.
    def _vmem_bytes(a, b):
        return 2 * a * H * itemsize + 2 * b * H * itemsize + 2 * a * b * out_itemsize

    while _vmem_bytes(tn, tm) > vmem_budget_bytes and tn > 256:
        tn = _round_up(tn // 2, sub)
    while _vmem_bytes(tn, tm) > vmem_budget_bytes and tm > 128:
        tm //= 2

    Np = _round_up(N, tn)
    Mp = _round_up(M, tm)

    # Pad only when needed (skip the extra HBM read+write on aligned shapes).
    # Padded rows are zero: dot = 0 and norm = 0 (clamped by eps), so padded
    # outputs are finite and sliced away below.
    xp = x if Np == N else jnp.pad(x, ((0, Np - N), (0, 0)))
    yp = y if Mp == M else jnp.pad(y, ((0, Mp - M), (0, 0)))

    kernel = functools.partial(_similarity_kernel,
                               eps=float(eps), inv_temp=1.0 / float(temp))

    # NOTE(v7x megacore): with grid=(i over N, j over M) and both axes "parallel",
    # the 2-TC split may duplicate y streaming; large tn keeps that under the HBM
    # roofline. Swap grid axis order if M >> N on v7x.
    out = pl.pallas_call(
        kernel,
        out_shape=jax.ShapeDtypeStruct((Np, Mp), out_dtype),
        grid=(Np // tn, Mp // tm),
        in_specs=[
            pl.BlockSpec((tn, H), lambda i, j: (i, 0)),   # x tile (resident over j)
            pl.BlockSpec((tm, H), lambda i, j: (j, 0)),   # y tile (streamed)
        ],
        out_specs=pl.BlockSpec((tn, tm), lambda i, j: (i, j)),
        compiler_params=pltpu.CompilerParams(
            dimension_semantics=("parallel", "parallel"),
            vmem_limit_bytes=48 << 20),
    )(xp, yp)

    if Np == N and Mp == M:
        return out
    return out[:N, :M]


def _reference(x, y, temp, eps=1e-8):
    x = x.astype(jnp.float32)
    y = y.astype(jnp.float32)
    dot = x @ y.T
    nx = jnp.sum(x * x, axis=-1, keepdims=True)
    ny = jnp.sum(y * y, axis=-1, keepdims=True)
    return dot / jnp.sqrt(jnp.maximum(nx * ny.T, eps * eps)) / temp


if __name__ == "__main__":
    key = jax.random.PRNGKey(0)
    kx, ky = jax.random.split(key)
    temp = 0.05  # typical SimCSE temperature

    # Small SimCSE-like f32 case: batch of 8 embeddings, hidden 32.
    N, M, H = 8, 8, 32
    x = jax.random.normal(kx, (N, H), dtype=jnp.float32)
    y = jax.random.normal(ky, (M, H), dtype=jnp.float32)
    out = jax.block_until_ready(similarity(x, y, temp))
    ref = _reference(x, y, temp)
    assert out.shape == (N, M)
    assert jnp.allclose(out, ref, atol=1e-4, rtol=1e-4), "f32 mismatch vs reference"

    # Non-tile-aligned shapes exercise the padding path.
    N2, M2, H2 = 10, 12, 48
    x2 = jax.random.normal(kx, (N2, H2), dtype=jnp.float32)
    y2 = jax.random.normal(ky, (M2, H2), dtype=jnp.float32)
    out2 = jax.block_until_ready(similarity(x2, y2, temp))
    ref2 = _reference(x2, y2, temp)
    assert out2.shape == (N2, M2)
    assert jnp.allclose(out2, ref2, atol=1e-4, rtol=1e-4), "padded mismatch vs reference"

    # bf16 operands feed the MXU natively (f32 accumulate).
    xb = x.astype(jnp.bfloat16)
    yb = y.astype(jnp.bfloat16)
    outb = jax.block_until_ready(similarity(xb, yb, temp))
    refb = _reference(xb, yb, temp)
    assert jnp.allclose(outb, refb, atol=5e-2, rtol=5e-2), "bf16 mismatch vs reference"

    print("KERNEL_OK")
</pallas_src>

<mosaic_0001>
module attributes {stable_mosaic.version = 11 : i64} {
  func.func @_similarity_kernel(%arg0: i32, %arg1: i32, %arg2: memref<8x32xf32, #tpu.memory_space<vmem>>, %arg3: memref<128x32xf32, #tpu.memory_space<vmem>>, %arg4: memref<8x128xf32, #tpu.memory_space<vmem>>) attributes {dimension_semantics = [#tpu.dimension_semantics<parallel>, #tpu.dimension_semantics<parallel>], iteration_bounds = array<i64: 1, 1>, scalar_prefetch = 0 : i64, scratch_operands = 0 : i64, tpu.core_type = #tpu.core_type<tc>, window_params = [{transform_indices = @transform_0, window_bounds = array<i64: 8, 32>}, {transform_indices = @transform_1, window_bounds = array<i64: 128, 32>}, {transform_indices = @transform_2, window_bounds = array<i64: 8, 128>}]} {
    %c0 = arith.constant 0 : index
    %c0_0 = arith.constant 0 : index
    %0 = vector.load %arg2[%c0, %c0_0] : memref<8x32xf32, #tpu.memory_space<vmem>>, vector<8x32xf32>
    %c0_1 = arith.constant 0 : index
    %c0_2 = arith.constant 0 : index
    %1 = vector.load %arg3[%c0_1, %c0_2] : memref<128x32xf32, #tpu.memory_space<vmem>>, vector<128x32xf32>
    %cst = arith.constant dense<0.000000e+00> : vector<8x128xf32>
    %2 = tpu.matmul %0, %1, %cst {dimension_numbers = #tpu.dot_dimension_numbers<[1], [1], [0], [0], [0, 0, 1, 0], [], []>} : vector<8x32xf32>, vector<128x32xf32>, vector<8x128xf32> -> vector<8x128xf32>
    %3 = arith.mulf %0, %0 : vector<8x32xf32>
    %cst_3 = arith.constant dense<0.000000e+00> : vector<8xf32>
    %4 = vector.multi_reduction <add>, %3, %cst_3 [1] : vector<8x32xf32> to vector<8xf32>
    %5 = vector.shape_cast %4 : vector<8xf32> to vector<8x1xf32>
    %6 = arith.mulf %1, %1 : vector<128x32xf32>
    %cst_4 = arith.constant dense<0.000000e+00> : vector<128xf32>
    %7 = vector.multi_reduction <add>, %6, %cst_4 [1] : vector<128x32xf32> to vector<128xf32>
    %8 = vector.shape_cast %7 : vector<128xf32> to vector<128x1xf32>
    %cst_5 = arith.constant dense<0.000000e+00> : vector<8x128xf32>
    %9 = tpu.matmul %5, %8, %cst_5 {dimension_numbers = #tpu.dot_dimension_numbers<[1], [1], [0], [0], [0, 0, 1, 0], [], []>} : vector<8x1xf32>, vector<128x1xf32>, vector<8x128xf32> -> vector<8x128xf32>
    %cst_6 = arith.constant 1.000000e-16 : f32
    %10 = vector.broadcast %cst_6 : f32 to vector<8x128xf32>
    %11 = arith.maximumf %9, %10 : vector<8x128xf32>
    %12 = math.rsqrt %11 : vector<8x128xf32>
    %13 = arith.mulf %2, %12 : vector<8x128xf32>
    %cst_7 = arith.constant 2.000000e+01 : f32
    %14 = vector.broadcast %cst_7 : f32 to vector<8x128xf32>
    %15 = arith.mulf %13, %14 : vector<8x128xf32>
    %c0_8 = arith.constant 0 : index
    %c0_9 = arith.constant 0 : index
    %16 = vector.load %arg4[%c0_8, %c0_9] : memref<8x128xf32, #tpu.memory_space<vmem>>, vector<8x128xf32>
    tpu.vector_store %arg4[%c0_8, %c0_9], %15 {strides = array<i32>} : memref<8x128xf32, #tpu.memory_space<vmem>>, vector<8x128xf32>,
    return
  }
  func.func @transform_0(%arg0: i32, %arg1: i32) -> (i32, i32) {
    %c0_i32 = arith.constant 0 : i32
    %c0_i32_0 = arith.constant 0 : i32
    return %arg0, %c0_i32 : i32, i32
  }
  func.func @transform_1(%arg0: i32, %arg1: i32) -> (i32, i32) {
    %c0_i32 = arith.constant 0 : i32
    %c0_i32_0 = arith.constant 0 : i32
    return %arg1, %c0_i32 : i32, i32
  }
  func.func @transform_2(%arg0: i32, %arg1: i32) -> (i32, i32) {
    %c0_i32 = arith.constant 0 : i32
    return %arg0, %arg1 : i32, i32
  }
}

</mosaic_0001>

<llo_original>
// kernel: tpu_custom_call.1
$region0: #{tpu_custom_call.1}
  #allocation0 [shape = 'u32[]', space=smem, size = 0x4, offset = 0x4, fixed_abs, tag = 'smem constant byte address 0x4 - core index']
  #allocation1 [shape = 'u32[144,128]{1,0:T(1,128)}', space=vmem, size = 0x12000, scoped, tag = 'internal scratch']
  %s0 = inlined_call_operand.vmem [shape: f32[8,32], index: 0, kind: input, shape index: {}]
  %s1 = inlined_call_operand.vmem [shape: f32[128,32], index: 1, kind: input, shape index: {}]
  %s2 = inlined_call_operand.hbm [shape: f32[8,128], index: 2, kind: output, shape index: {}]
  %s3 = sld [smem:[#allocation0]]
  $region18: #{tpu_custom_call.1} parent=0
    _
  %s5 = ssub.s32 1, %s3
  %s6 = scalar_select 0, %s5, %s3
  $region1: #{tpu_custom_call.1} parent=0
    #allocation2 [shape = 'u8[4096]{0}', space=vmem, size = 0x1000, scoped, tag = 'output window, operand 0, single buffered']
    #allocation3 [shape = 's32[1]{0}', space=sflag, size = 0x4, scoped, tag = 'scoped memory for tpu_custom_call.1']
    %7 = vsyncpa [#allocation3], 0
    // Predicated region
    $region2: #{tpu_custom_call.1} parent=1 // pred_check
      _
    $region3: #{tpu_custom_call.1} parent=1 // pred_check_branch
      %9 = sbr.rel (0) target = $region5
    $region4: #{tpu_custom_call.1} parent=1 // pred_region
      _
    $region5: #{tpu_custom_call.1} parent=1 // pred_fallthru
      _
    // Predicated region
    $region6: #{tpu_custom_call.1} parent=1 // pred_check
      _
    $region7: #{tpu_custom_call.1} parent=1 // pred_check_branch
      %11 = sbr.rel (0) target = $region9
    $region8: #{tpu_custom_call.1} parent=1 // pred_region
      _
    $region9: #{tpu_custom_call.1} parent=1 // pred_fallthru
      _
    %v12 = vld [vmem:[%s0] sm:$0xff]
    %v13 = vld [vmem:[%s1] sm:$0xff]
    %v14 = vld [vmem:[%s1 + $0x8] sm:$0xff]
    %v15 = vld [vmem:[%s1 + $0x10] sm:$0xff]
    %v16 = vld [vmem:[%s1 + $0x18] sm:$0xff]
    %v17 = vld [vmem:[%s1 + $0x20] sm:$0xff]
    %v18 = vld [vmem:[%s1 + $0x28] sm:$0xff]
    %v19 = vld [vmem:[%s1 + $0x30] sm:$0xff]
    %v20 = vld [vmem:[%s1 + $0x38] sm:$0xff]
    %v21 = vld [vmem:[%s1 + $0x40] sm:$0xff]
    %v22 = vld [vmem:[%s1 + $0x48] sm:$0xff]
    %v23 = vld [vmem:[%s1 + $0x50] sm:$0xff]
    %v24 = vld [vmem:[%s1 + $0x58] sm:$0xff]
    %v25 = vld [vmem:[%s1 + $0x60] sm:$0xff]
    %v26 = vld [vmem:[%s1 + $0x68] sm:$0xff]
    %v27 = vld [vmem:[%s1 + $0x70] sm:$0xff]
    %v28 = vld [vmem:[%s1 + $0x78] sm:$0xff]
    %vm29 = vcmask 261120
    %v31 = vsel %vm29, %v12, 0
    %v34 = vsel %vm29, %v13, 0
    %v37 = vsel %vm29, %v14, 0
    %v40 = vsel %vm29, %v15, 0
    %v43 = vsel %vm29, %v16, 0
    %v46 = vsel %vm29, %v17, 0
    %v49 = vsel %vm29, %v18, 0
    %v52 = vsel %vm29, %v19, 0
    %v55 = vsel %vm29, %v20, 0
    %v58 = vsel %vm29, %v21, 0
    %v61 = vsel %vm29, %v22, 0
    %v64 = vsel %vm29, %v23, 0
    %v67 = vsel %vm29, %v24, 0
    %v70 = vsel %vm29, %v25, 0
    %v73 = vsel %vm29, %v26, 0
    %v76 = vsel %vm29, %v27, 0
    %v79 = vsel %vm29, %v28, 0
    %81 = vmatprep.subr.mxu0 0.0
    %82 = vmatpush1.xpose.msra.mxu0 %v34
    %83 = vmatprep.subr.mxu0 0.0
    %84 = vmatpush1.xpose.msra.mxu0 %v37
    %85 = vmatprep.subr.mxu0 0.0
    %86 = vmatpush1.xpose.msra.mxu0 %v40
    %87 = vmatprep.subr.mxu0 0.0
    %88 = vmatpush1.xpose.msra.mxu0 %v43
    %89 = vmatprep.subr.mxu0 0.0
    %90 = vmatpush1.xpose.msra.mxu0 %v46
    %91 = vmatprep.subr.mxu0 0.0
    %92 = vmatpush1.xpose.msra.mxu0 %v49
    %93 = vmatprep.subr.mxu0 0.0
    %94 = vmatpush1.xpose.msra.mxu0 %v52
    %95 = vmatprep.subr.mxu0 0.0
    %96 = vmatpush1.xpose.msra.mxu0 %v55
    %97 = vmatprep.subr.mxu0 0.0
    %98 = vmatpush1.xpose.msra.mxu0 %v58
    %99 = vmatprep.subr.mxu0 0.0
    %100 = vmatpush1.xpose.msra.mxu0 %v61
    %101 = vmatprep.subr.mxu0 0.0
    %102 = vmatpush1.xpose.msra.mxu0 %v64
    %103 = vmatprep.subr.mxu0 0.0
    %104 = vmatpush1.xpose.msra.mxu0 %v67
    %105 = vmatprep.subr.mxu0 0.0
    %106 = vmatpush1.xpose.msra.mxu0 %v70
    %107 = vmatprep.subr.mxu0 0.0
    %108 = vmatpush1.xpose.msra.mxu0 %v73
    %109 = vmatprep.subr.mxu0 0.0
    %110 = vmatpush1.xpose.msra.mxu0 %v76
    %111 = vmatprep.subr.mxu0 0.0
    %112 = vmatpush1.xpose.msra.mxu0 %v79
    %113 = vmatprep.subr.mxu0 0.0
    %114 = vmatpush1.xpose.msra.mxu0 0.0
    %115 = vmatprep.subr.mxu0 0.0
    %116 = vmatpush1.xpose.msra.mxu0 0.0
    %117 = vmatprep.subr.mxu0 0.0
    %118 = vmatpush1.xpose.msra.mxu0 0.0
    %119 = vmatprep.subr.mxu0 0.0
    %120 = vmatpush1.xpose.msra.mxu0 0.0
    %121 = vmatprep.subr.mxu0 0.0
    %122 = vmatpush1.xpose.msra.mxu0 0.0
    %123 = vmatprep.subr.mxu0 0.0
    %124 = vmatpush1.xpose.msra.mxu0 0.0
    %125 = vmatprep.subr.mxu0 0.0
    %126 = vmatpush1.xpose.msra.mxu0 0.0
    %127 = vmatprep.subr.mxu0 0.0
    %128 = vmatpush1.xpose.msra.mxu0 0.0
    %129 = vmatprep.subr.mxu0 0.0
    %130 = vmatpush1.xpose.msra.mxu0 0.0
    %131 = vmatprep.subr.mxu0 0.0
    %132 = vmatpush1.xpose.msra.mxu0 0.0
    %133 = vmatprep.subr.mxu0 0.0
    %134 = vmatpush1.xpose.msra.mxu0 0.0
    %135 = vmatprep.subr.mxu0 0.0
    %136 = vmatpush1.xpose.msra.mxu0 0.0
    %137 = vmatprep.subr.mxu0 0.0
    %138 = vmatpush1.xpose.msra.mxu0 0.0
    %139 = vmatprep.subr.mxu0 0.0
    %140 = vmatpush1.xpose.msra.mxu0 0.0
    %141 = vmatprep.subr.mxu0 0.0
    %142 = vmatpush1.xpose.msra.mxu0 0.0
    %143 = vmatprep.subr.mxu0 0.0
    %144 = vmatpush1.xpose.msra.mxu0 0.0
    %145 = vmatprep.mubr.f32.mxu0 0.0
    %146 = vmatmul.mubr.f32.gmra.mrb[0].mxu0 %v31
    %v147 = vpop.f32.mrb[0].mxu0
    %v148 = vadd.f32 0.0, %v147
    %v149 = vpop.f32.mrb[0].mxu0
    %150 = vdwg.mxu0
    %v151 = vmul.f32 %v12, %v12
    %v152 = vsel %vm29, %v151, 0.0
    %153 = vadd.xlane.f32.xlu0 %v152
    %v154 = vpop.xlane.xlu0 %153
    %v155 = vmul.f32 %v13, %v13
    %v156 = vmul.f32 %v14, %v14
    %v157 = vmul.f32 %v15, %v15
    %v158 = vmul.f32 %v16, %v16
    %v159 = vmul.f32 %v17, %v17
    %v160 = vmul.f32 %v18, %v18
    %v161 = vmul.f32 %v19, %v19
    %v162 = vmul.f32 %v20, %v20
    %v163 = vmul.f32 %v21, %v21
    %v164 = vmul.f32 %v22, %v22
    %v165 = vmul.f32 %v23, %v23
    %v166 = vmul.f32 %v24, %v24
    %v167 = vmul.f32 %v25, %v25
    %v168 = vmul.f32 %v26, %v26
    %v169 = vmul.f32 %v27, %v27
    %v170 = vmul.f32 %v28, %v28
    %v171 = vsel %vm29, %v155, 0.0
    %172 = vadd.xlane.f32.xlu0 %v171
    %v173 = vpop.xlane.xlu0 %172
    %v174 = vsel %vm29, %v156, 0.0
    %175 = vadd.xlane.f32.xlu0 %v174
    %v176 = vpop.xlane.xlu0 %175
    %v177 = vsel %vm29, %v157, 0.0
    %178 = vadd.xlane.f32.xlu0 %v177
    %v179 = vpop.xlane.xlu0 %178
    %v180 = vsel %vm29, %v158, 0.0
    %181 = vadd.xlane.f32.xlu0 %v180
    %v182 = vpop.xlane.xlu0 %181
    %v183 = vsel %vm29, %v159, 0.0
    %184 = vadd.xlane.f32.xlu0 %v183
    %v185 = vpop.xlane.xlu0 %184
    %v186 = vsel %vm29, %v160, 0.0
    %187 = vadd.xlane.f32.xlu0 %v186
    %v188 = vpop.xlane.xlu0 %187
    %v189 = vsel %vm29, %v161, 0.0
    %190 = vadd.xlane.f32.xlu0 %v189
    %v191 = vpop.xlane.xlu0 %190
    %v192 = vsel %vm29, %v162, 0.0
    %193 = vadd.xlane.f32.xlu0 %v192
    %v194 = vpop.xlane.xlu0 %193
    %v195 = vsel %vm29, %v163, 0.0
    %196 = vadd.xlane.f32.xlu0 %v195
    %v197 = vpop.xlane.xlu0 %196
    %v198 = vsel %vm29, %v164, 0.0
    %199 = vadd.xlane.f32.xlu0 %v198
    %v200 = vpop.xlane.xlu0 %199
    %v201 = vsel %vm29, %v165, 0.0
    %202 = vadd.xlane.f32.xlu0 %v201
    %v203 = vpop.xlane.xlu0 %202
    %v204 = vsel %vm29, %v166, 0.0
    %205 = vadd.xlane.f32.xlu0 %v204
    %v206 = vpop.xlane.xlu0 %205
    %v207 = vsel %vm29, %v167, 0.0
    %208 = vadd.xlane.f32.xlu0 %v207
    %v209 = vpop.xlane.xlu0 %208
    %v210 = vsel %vm29, %v168, 0.0
    %211 = vadd.xlane.f32.xlu0 %v210
    %v212 = vpop.xlane.xlu0 %211
    %v213 = vsel %vm29, %v169, 0.0
    %214 = vadd.xlane.f32.xlu0 %v213
    %v215 = vpop.xlane.xlu0 %214
    %v216 = vsel %vm29, %v170, 0.0
    %217 = vadd.xlane.f32.xlu0 %v216
    %v218 = vpop.xlane.xlu0 %217
    %vm219 = vcmask 7168
    %v221 = vsel %vm219, %v154, 0
    %v224 = vsel %vm219, %v173, 0
    %v227 = vsel %vm219, %v176, 0
    %v230 = vsel %vm219, %v179, 0
    %v233 = vsel %vm219, %v182, 0
    %v236 = vsel %vm219, %v185, 0
    %v239 = vsel %vm219, %v188, 0
    %v242 = vsel %vm219, %v191, 0
    %v245 = vsel %vm219, %v194, 0
    %v248 = vsel %vm219, %v197, 0
    %v251 = vsel %vm219, %v200, 0
    %v254 = vsel %vm219, %v203, 0
    %v257 = vsel %vm219, %v206, 0
    %v260 = vsel %vm219, %v209, 0
    %v263 = vsel %vm219, %v212, 0
    %v266 = vsel %vm219, %v215, 0
    %v269 = vsel %vm219, %v218, 0
    %271 = vmatprep.subr.mxu0 0.0
    %272 = vmatpush1.xpose.msra.mxu0 %v224
    %273 = vmatprep.subr.mxu0 0.0
    %274 = vmatpush1.xpose.msra.mxu0 %v227
    %275 = vmatprep.subr.mxu0 0.0
    %276 = vmatpush1.xpose.msra.mxu0 %v230
    %277 = vmatprep.subr.mxu0 0.0
    %278 = vmatpush1.xpose.msra.mxu0 %v233
    %279 = vmatprep.subr.mxu0 0.0
    %280 = vmatpush1.xpose.msra.mxu0 %v236
    %281 = vmatprep.subr.mxu0 0.0
    %282 = vmatpush1.xpose.msra.mxu0 %v239
    %283 = vmatprep.subr.mxu0 0.0
    %284 = vmatpush1.xpose.msra.mxu0 %v242
    %285 = vmatprep.subr.mxu0 0.0
    %286 = vmatpush1.xpose.msra.mxu0 %v245
    %287 = vmatprep.subr.mxu0 0.0
    %288 = vmatpush1.xpose.msra.mxu0 %v248
    %289 = vmatprep.subr.mxu0 0.0
    %290 = vmatpush1.xpose.msra.mxu0 %v251
    %291 = vmatprep.subr.mxu0 0.0
    %292 = vmatpush1.xpose.msra.mxu0 %v254
    %293 = vmatprep.subr.mxu0 0.0
    %294 = vmatpush1.xpose.msra.mxu0 %v257
    %295 = vmatprep.subr.mxu0 0.0
    %296 = vmatpush1.xpose.msra.mxu0 %v260
    %297 = vmatprep.subr.mxu0 0.0
    %298 = vmatpush1.xpose.msra.mxu0 %v263
    %299 = vmatprep.subr.mxu0 0.0
    %300 = vmatpush1.xpose.msra.mxu0 %v266
    %301 = vmatprep.subr.mxu0 0.0
    %302 = vmatpush1.xpose.msra.mxu0 %v269
    %303 = vmatprep.subr.mxu0 0.0
    %304 = vmatpush1.xpose.msra.mxu0 0.0
    %305 = vmatprep.subr.mxu0 0.0
    %306 = vmatpush1.xpose.msra.mxu0 0.0
    %307 = vmatprep.subr.mxu0 0.0
    %308 = vmatpush1.xpose.msra.mxu0 0.0
    %309 = vmatprep.subr.mxu0 0.0
    %310 = vmatpush1.xpose.msra.mxu0 0.0
    %311 = vmatprep.subr.mxu0 0.0
    %312 = vmatpush1.xpose.msra.mxu0 0.0
    %313 = vmatprep.subr.mxu0 0.0
    %314 = vmatpush1.xpose.msra.mxu0 0.0
    %315 = vmatprep.subr.mxu0 0.0
    %316 = vmatpush1.xpose.msra.mxu0 0.0
    %317 = vmatprep.subr.mxu0 0.0
    %318 = vmatpush1.xpose.msra.mxu0 0.0
    %319 = vmatprep.subr.mxu0 0.0
    %320 = vmatpush1.xpose.msra.mxu0 0.0
    %321 = vmatprep.subr.mxu0 0.0
    %322 = vmatpush1.xpose.msra.mxu0 0.0
    %323 = vmatprep.subr.mxu0 0.0
    %324 = vmatpush1.xpose.msra.mxu0 0.0
    %325 = vmatprep.subr.mxu0 0.0
    %326 = vmatpush1.xpose.msra.mxu0 0.0
    %327 = vmatprep.subr.mxu0 0.0
    %328 = vmatpush1.xpose.msra.mxu0 0.0
    %329 = vmatprep.subr.mxu0 0.0
    %330 = vmatpush1.xpose.msra.mxu0 0.0
    %331 = vmatprep.subr.mxu0 0.0
    %332 = vmatpush1.xpose.msra.mxu0 0.0
    %333 = vmatprep.subr.mxu0 0.0
    %334 = vmatpush1.xpose.msra.mxu0 0.0
    %335 = vmatprep.mubr.f32.mxu0 0.0
    %336 = vmatmul.mubr.f32.gmra.mrb[0].mxu0 %v221
    %v337 = vpop.f32.mrb[0].mxu0
    %v338 = vadd.f32 0.0, %v337
    %v339 = vpop.f32.mrb[0].mxu0
    %340 = vdwg.mxu0
    %v341 = vmax.f32 %v338, 1e-16
    %v342 = vrsqrt.pop %v341
    %v343 = vmul.f32 %v148, %v342
    %v344 = vmul.f32 %v343, 20.0
    %345 = vst [vmem:[#allocation2] sm:$0xff] %v344
    // Predicated region
    $region10: #{tpu_custom_call.1} parent=1 // pred_check
      _
    $region11: #{tpu_custom_call.1} parent=1 // pred_check_branch
      %347 = sbr.rel (0) target = $region13
    $region12: #{tpu_custom_call.1} parent=1 // pred_region
      %s349 = ssub.s32 128, 128
      %350 = vsyncadd [#allocation3], %s349
      %s352 = sshll.u32 [#allocation2], 4
      %s353 = int_to_ptr.vmem [resolvable:$true] %s352
      %355 = dma.vmem_to_hbm [thread:$0]  %s353, 128, %s2, [#allocation3]
    $region13: #{tpu_custom_call.1} parent=1 // pred_fallthru
      _
    // Predicated region
    $region14: #{tpu_custom_call.1} parent=1 // pred_check
      _
    $region15: #{tpu_custom_call.1} parent=1 // pred_check_branch
      %357 = sbr.rel (0) target = $region17
    $region16: #{tpu_custom_call.1} parent=1 // pred_region
      %358 = dma.done [#allocation3], 128
    $region17: #{tpu_custom_call.1} parent=1 // pred_fallthru
      _
    %359 = vsyncpa [#allocation3], 1

</llo_original>
